<compile_context>
chip_gen: v6e
topology: v6e:2x2x1
jax: 0.10.0
libtpu: 0.0.40
codegen_flags: <defaults>
</compile_context>

<pallas_src>
import math

import jax
import jax.numpy as jnp
from jax.experimental import pallas as pl
from jax.experimental.pallas import tpu as pltpu

_TARGET_COPY_BLOCK_BYTES = 4 * 1024 * 1024   # ~4 MiB blocks on the copy path
_LANE_CAP_COPY = 2048                        # lane-dim cap (copy path)
_TILE_CAP_T = 512                            # tile cap per side (transpose path)
_VMEM_LIMIT_BYTES = 48 * 1024 * 1024         # fits v7x 64 MiB/TC, > v5e default


def _copy_kernel(x_ref, o_ref):
    # Pure data movement: the B<->D swap is done entirely by the index_maps.
    o_ref[...] = x_ref[...]


def _transpose2d_kernel(x_ref, o_ref):
    # Whole-block lane-dense 2-D transpose (XLU), hidden under the HBM DMA.
    o_ref[...] = jnp.swapaxes(x_ref[...], 0, 1)


def _lane_tile(dim, cap):
    """Full dim if it fits, else the largest multiple of 128 <= cap."""
    return dim if dim <= cap else (cap // 128) * 128


def _sorted_grid(extents):
    """Order grid axes largest-first (balanced dual-TC split on v7x).

    Returns (grid, pos) where pos[logical_axis] = position in the grid."""
    order = sorted(range(len(extents)), key=lambda i: -int(extents[i]))
    pos = [0] * len(extents)
    for gp, ax in enumerate(order):
        pos[ax] = gp
    return tuple(int(extents[ax]) for ax in order), pos


def trans_forward(x, dim1, dim2):
    """Equivalent of torch.Tensor.transpose(dim1, dim2) as a Pallas TPU kernel."""
    ndim = x.ndim
    d1, d2 = sorted((dim1 % ndim, dim2 % ndim))
    perm = list(range(ndim))
    perm[d1], perm[d2] = perm[d2], perm[d1]
    if d1 == d2:
        return x
    out_shape = tuple(x.shape[p] for p in perm)

    shape = x.shape
    A = math.prod(shape[:d1])            # leading group
    B = shape[d1]                        # first swapped axis
    C = math.prod(shape[d1 + 1:d2])      # middle group (stays in place)
    D = shape[d2]                        # second swapped axis
    E = math.prod(shape[d2 + 1:])        # trailing group (stays minor)

    itemsize = x.dtype.itemsize
    if B == 1 or D == 1 or x.size == 0 or itemsize not in (1, 2, 4):
        # Size-1 swaps are pure metadata reshapes; 8-byte dtypes fall back.
        return jnp.transpose(x, perm)

    sub = 8 * (4 // itemsize)            # sublane packing: 8 f32 / 16 bf16 / 32 int8
    cost = pl.CostEstimate(flops=0, transcendentals=0,
                           bytes_accessed=2 * x.size * itemsize)

    if E > 1:
        # ---- Minor (lane) axis untouched: pure-copy kernel, swap in index_maps.
        # 6-D views keep the swapped axes out of the (sublane, lane) slots.
        x6 = x.reshape(A, B, C, D, 1, E)
        if B <= D:
            S, T = B, D                  # squeeze the smaller swapped dim (grid axis)
        else:
            S, T = D, B                  # tile the larger one -> big blocks
        eb = _lane_tile(E, _LANE_CAP_COPY)
        tt = min(T, max(1, _TARGET_COPY_BLOCK_BYTES // (eb * itemsize)))
        if tt < T and tt > sub:
            tt = (tt // sub) * sub       # keep the sublane dim packing-aligned

        # logical axes: 0:a(A) 1:c(C) 2:s(squeezed swap dim) 3:t(tiled blocks) 4:e(E blocks)
        extents = (A, C, S, pl.cdiv(T, tt), pl.cdiv(E, eb))
        grid, p = _sorted_grid(extents)

        # tiled swapped dim sits at array index 3 (the other one squeezed at index 1)
        spec_t3 = pl.BlockSpec(
            (None, None, None, tt, None, eb),
            lambda *g: (g[p[0]], g[p[2]], g[p[1]], g[p[3]], 0, g[p[4]]))
        # tiled swapped dim sits at array index 1
        spec_t1 = pl.BlockSpec(
            (None, tt, None, None, None, eb),
            lambda *g: (g[p[0]], g[p[3]], g[p[1]], g[p[2]], 0, g[p[4]]))

        in_spec, out_spec = (spec_t3, spec_t1) if B <= D else (spec_t1, spec_t3)

        y = pl.pallas_call(
            _copy_kernel,
            out_shape=jax.ShapeDtypeStruct((A, D, C, B, 1, E), x.dtype),
            grid=grid,
            in_specs=[in_spec],
            out_specs=out_spec,
            compiler_params=pltpu.CompilerParams(
                dimension_semantics=("parallel",) * len(grid),
                vmem_limit_bytes=_VMEM_LIMIT_BYTES),
            cost_estimate=cost,
        )(x6)
    else:
        # ---- Swap touches the minor axis: whole-block lane-dense 2-D transpose.
        # Dummy axis keeps C out of the sublane slot -> C is a plain grid axis.
        x5 = x.reshape(A, B, C, 1, D)
        tb = _lane_tile(B, _TILE_CAP_T)
        td = _lane_tile(D, _TILE_CAP_T)

        # logical axes: 0:a(A) 1:c(C) 2:i(B blocks) 3:j(D blocks)
        extents = (A, C, pl.cdiv(B, tb), pl.cdiv(D, td))
        grid, p = _sorted_grid(extents)

        in_spec = pl.BlockSpec(
            (None, tb, None, None, td),
            lambda *g: (g[p[0]], g[p[2]], g[p[1]], 0, g[p[3]]))
        out_spec = pl.BlockSpec(
            (None, td, None, None, tb),
            lambda *g: (g[p[0]], g[p[3]], g[p[1]], 0, g[p[2]]))

        y = pl.pallas_call(
            _transpose2d_kernel,
            out_shape=jax.ShapeDtypeStruct((A, D, C, 1, B), x.dtype),
            grid=grid,
            in_specs=[in_spec],
            out_specs=out_spec,
            compiler_params=pltpu.CompilerParams(
                dimension_semantics=("parallel",) * len(grid),
                vmem_limit_bytes=_VMEM_LIMIT_BYTES),
            cost_estimate=cost,
        )(x5)

    # Un-grouping the flattened dim groups back to the permuted shape is a
    # contiguous reshape (no data movement).
    return y.reshape(out_shape)


class trans:
    """Thin functional mirror of the PyTorch module."""

    def __init__(self, dim1, dim2):
        self.dim1 = dim1
        self.dim2 = dim2

    def __call__(self, x):
        return trans_forward(x, self.dim1, self.dim2)


if __name__ == "__main__":
    key = jax.random.PRNGKey(0)
    k1, k2, k3, k4 = jax.random.split(key, 4)

    # Case 1: trans(1, 2) on an NCHW-style feature map (E>1 pure-copy path, B<D).
    x1 = jax.random.normal(k1, (2, 4, 16, 16), dtype=jnp.float32)
    y1 = jax.block_until_ready(trans(1, 2)(x1))
    r1 = jnp.swapaxes(x1, 1, 2)
    assert y1.shape == r1.shape and jnp.array_equal(y1, r1), "case 1 mismatch"

    # Case 2: trans(1, 2) on a (B, C, N, 1) correspondence tensor as in ncmnet
    # (trailing dim 1 -> the swap hits the minor axis: 2-D transpose path).
    x2 = jax.random.normal(k2, (2, 32, 128, 1), dtype=jnp.float32)
    y2 = jax.block_until_ready(trans(1, 2)(x2))
    r2 = jnp.swapaxes(x2, 1, 2)
    assert y2.shape == r2.shape and jnp.array_equal(y2, r2), "case 2 mismatch"

    # Case 3: trans(1, 2) with B > D (exercises the other tiling branch).
    x3 = jax.random.normal(k3, (2, 64, 8, 16), dtype=jnp.float32)
    y3 = jax.block_until_ready(trans(1, 2)(x3))
    r3 = jnp.swapaxes(x3, 1, 2)
    assert y3.shape == r3.shape and jnp.array_equal(y3, r3), "case 3 mismatch"

    # Case 4: non-adjacent swap trans(0, 2) (exercises a real middle group C>1).
    x4 = jax.random.normal(k4, (4, 8, 16, 32), dtype=jnp.float32)
    y4 = jax.block_until_ready(trans(0, 2)(x4))
    r4 = jnp.swapaxes(x4, 0, 2)
    assert y4.shape == r4.shape and jnp.array_equal(y4, r4), "case 4 mismatch"

    print("KERNEL_OK")
</pallas_src>

<mosaic_0001>
module attributes {stable_mosaic.version = 11 : i64} {
  func.func @_copy_kernel(%arg0: i32, %arg1: i32, %arg2: i32, %arg3: i32, %arg4: i32, %arg5: memref<1x1x1x16x1x16xf32, #tpu.memory_space<vmem>>, %arg6: memref<1x16x1x1x1x16xf32, #tpu.memory_space<vmem>>) attributes {dimension_semantics = [#tpu.dimension_semantics<parallel>, #tpu.dimension_semantics<parallel>, #tpu.dimension_semantics<parallel>, #tpu.dimension_semantics<parallel>, #tpu.dimension_semantics<parallel>], iteration_bounds = array<i64: 4, 2, 1, 1, 1>, scalar_prefetch = 0 : i64, scratch_operands = 0 : i64, tpu.core_type = #tpu.core_type<tc>, window_params = [{transform_indices = @transform_0, window_bounds = array<i64: 1, 1, 1, 16, 1, 16>}, {transform_indices = @transform_1, window_bounds = array<i64: 1, 16, 1, 1, 1, 16>}]} {
    %c0 = arith.constant 0 : index
    %c0_0 = arith.constant 0 : index
    %c0_1 = arith.constant 0 : index
    %c0_2 = arith.constant 0 : index
    %c0_3 = arith.constant 0 : index
    %c0_4 = arith.constant 0 : index
    %0 = vector.load %arg5[%c0, %c0_0, %c0_1, %c0_2, %c0_3, %c0_4] : memref<1x1x1x16x1x16xf32, #tpu.memory_space<vmem>>, vector<1x1x1x16x1x16xf32>
    %1 = vector.shape_cast %0 : vector<1x1x1x16x1x16xf32> to vector<16x16xf32>
    %c0_5 = arith.constant 0 : index
    %c0_6 = arith.constant 0 : index
    %c0_7 = arith.constant 0 : index
    %c0_8 = arith.constant 0 : index
    %c0_9 = arith.constant 0 : index
    %c0_10 = arith.constant 0 : index
    %2 = vector.load %arg6[%c0_5, %c0_6, %c0_7, %c0_8, %c0_9, %c0_10] : memref<1x16x1x1x1x16xf32, #tpu.memory_space<vmem>>, vector<1x16x1x1x1x16xf32>
    %3 = vector.shape_cast %2 : vector<1x16x1x1x1x16xf32> to vector<16x16xf32>
    %4 = vector.shape_cast %1 : vector<16x16xf32> to vector<1x16x1x1x1x16xf32>
    tpu.vector_store %arg6[%c0_5, %c0_6, %c0_7, %c0_8, %c0_9, %c0_10], %4 {strides = array<i32>} : memref<1x16x1x1x1x16xf32, #tpu.memory_space<vmem>>, vector<1x16x1x1x1x16xf32>,
    return
  }
  func.func @transform_0(%arg0: i32, %arg1: i32, %arg2: i32, %arg3: i32, %arg4: i32) -> (i32, i32, i32, i32, i32, i32) {
    %c0_i32 = arith.constant 0 : i32
    %c0_i32_0 = arith.constant 0 : i32
    return %arg1, %arg0, %arg2, %arg3, %c0_i32, %arg4 : i32, i32, i32, i32, i32, i32
  }
  func.func @transform_1(%arg0: i32, %arg1: i32, %arg2: i32, %arg3: i32, %arg4: i32) -> (i32, i32, i32, i32, i32, i32) {
    %c0_i32 = arith.constant 0 : i32
    %c0_i32_0 = arith.constant 0 : i32
    return %arg1, %arg3, %arg2, %arg0, %c0_i32, %arg4 : i32, i32, i32, i32, i32, i32
  }
}

</mosaic_0001>

<llo_original>
// kernel: tpu_custom_call.1
$region0: #{tpu_custom_call.1}
  #allocation0 [shape = 'u32[]', space=smem, size = 0x4, offset = 0x4, fixed_abs, tag = 'smem constant byte address 0x4 - core index']
  #allocation1 [shape = 'u32[144,128]{1,0:T(1,128)}', space=vmem, size = 0x12000, scoped, tag = 'internal scratch']
  %s0 = inlined_call_operand.hbm [shape: f32[2,4,1,16,1,16], index: 0, kind: input, shape index: {}]
  %s1 = inlined_call_operand.hbm [shape: f32[2,16,1,4,1,16], index: 1, kind: output, shape index: {}]
  %s2 = sld [smem:[#allocation0]]
  $region41: #{tpu_custom_call.1} parent=0
    _
  %s4 = ssub.s32 1, %s2
  %s5 = scalar_select 0, %s4, %s2
  $region1: #{tpu_custom_call.1} parent=0
    #allocation2 [shape = 'u8[16384]{0}', space=vmem, size = 0x4000, scoped, tag = 'input window, operand 0']
    #allocation3 [shape = 's32[2]{0}', space=sflag, size = 0x8, scoped, tag = 'scoped memory for tpu_custom_call.1']
    #allocation4 [shape = 's32[2]{0}', space=sflag, size = 0x8, scoped, tag = 'scoped memory for tpu_custom_call.1']
    #allocation5 [shape = 'u8[16384]{0}', space=vmem, size = 0x4000, scoped, tag = 'output window, operand 0']
    %6 = vsyncpa [#allocation3], 0
    %s7 = scalar_lea.sflag [#allocation3], 1
    %8 = vsyncpa %s7, 0
    %9 = vsyncpa [#allocation4], 0
    %s10 = scalar_lea.sflag [#allocation4], 1
    %11 = vsyncpa %s10, 0
    loop: start=0, step=1, limit=10
    $region2: #{tpu_custom_call.1} parent=1 // loop_pre_header
      _
    $region3: #{tpu_custom_call.1} parent=1 // loop_header
      %s13 = sphi 0, %s17
      %p14 = scmp.ge.s32.totalorder %s13, 10
      %s20 = sphi 0, %s53
      %s21 = sphi 0, %s49
      %s22 = sphi 0, %s45
      %s23 = sphi 0, %s41
      %s24 = sphi 0, %s37
      %s25 = sphi 0, %s20
      %s26 = sphi 0, %s21
      %s27 = sphi 0, %s22
      %s28 = sphi 0, %s23
      %s29 = sphi 0, %s24
      %s30 = sphi 0, %s25
      %s31 = sphi 0, %s26
      %s32 = sphi 0, %s27
      %s33 = sphi 0, %s28
      %s34 = sphi 0, %s29
      %s64 = sphi 0, %s66
      %s67 = sphi 0, %s64
      %s68 = sphi 0, %s67
      %s84 = sphi 0, %s68
      %s98 = sphi 0, %s100
      %s101 = sphi 0, %s98
      %s102 = sphi 0, %s101
      %s118 = sphi 0, %s102
    $region4: #{tpu_custom_call.1} parent=1 // loop_header_branch
      %16 = sbr.rel (%p14) target = $region8
    $region5: #{tpu_custom_call.1} parent=1 // loop_body
      %s18 = ssub.s32 %s13, 1
      %s19 = ssub.s32 %s13, 2
      %s35 = sadd.s32 1, %s24
      %p36 = scmp.ge.s32.totalorder %s35, 1
      %s37 = scalar_select %p36, 0, %s35
      %s38 = sadd.s32 1, %s23
      %s39 = scalar_select %p36, %s38, %s23
      %p40 = scmp.ge.s32.totalorder %s39, 1
      %s41 = scalar_select %p40, 0, %s39
      %s42 = sadd.s32 1, %s22
      %s43 = scalar_select %p40, %s42, %s22
      %p44 = scmp.ge.s32.totalorder %s43, 1
      %s45 = scalar_select %p44, 0, %s43
      %s46 = sadd.s32 1, %s21
      %s47 = scalar_select %p44, %s46, %s21
      %p48 = scmp.ge.s32.totalorder %s47, 2
      %s49 = scalar_select %p48, 0, %s47
      %s50 = sadd.s32 1, %s20
      %s51 = scalar_select %p48, %s50, %s20
      %p52 = scmp.ge.s32.totalorder %s51, 4
      %s53 = scalar_select %p52, 0, %s51
      %s54 = ssub.s32 %s21, %s49
      %s55 = ssub.s32 %s20, %s53
      %s56 = sor.u32 %s54, %s55
      %s57 = ssub.s32 %s22, %s45
      %s58 = sor.u32 %s56, %s57
      %s59 = ssub.s32 %s23, %s41
      %s60 = sor.u32 %s58, %s59
      %s61 = ssub.s32 %s24, %s37
      %s62 = sor.u32 %s60, %s61
      %p63 = scmp.eq.s32.totalorder %s62, 0
      %s65 = sadd.s32 %s64, 1
      %s66 = scalar_select %p63, %s64, %s65
      %p69 = pneg %p63
      %p70 = scmp.eq.s32.totalorder %s13, 7
      %p71 = por %p69, %p70
      %p72 = scmp.ne.s32.totalorder %s64, %s67
      %p73 = scmp.eq.s32.totalorder %s13, 0
      %p74 = por %p72, %p73
      %p75 = scmp.ne.s32.totalorder %s64, %s67
      %p76 = scmp.eq.s32.totalorder %s18, 7
      %p77 = por %p75, %p76
      %p78 = scmp.ne.s32.totalorder %s67, %s68
      %p79 = scmp.eq.s32.totalorder %s18, 0
      %p80 = por %p78, %p79
      %p81 = scmp.ne.s32.totalorder %s67, %s68
      %p82 = scmp.eq.s32.totalorder %s19, 7
      %p83 = por %p81, %p82
      %p85 = scmp.ne.s32.totalorder %s68, %s84
      %p86 = scmp.eq.s32.totalorder %s19, 0
      %p87 = por %p85, %p86
      %s88 = ssub.s32 %s21, %s49
      %s89 = ssub.s32 %s23, %s41
      %s90 = sor.u32 %s88, %s89
      %s91 = ssub.s32 %s22, %s45
      %s92 = sor.u32 %s90, %s91
      %s93 = ssub.s32 %s20, %s53
      %s94 = sor.u32 %s92, %s93
      %s95 = ssub.s32 %s24, %s37
      %s96 = sor.u32 %s94, %s95
      %p97 = scmp.eq.s32.totalorder %s96, 0
      %s99 = sadd.s32 %s98, 1
      %s100 = scalar_select %p97, %s98, %s99
      %p103 = pneg %p97
      %p104 = scmp.eq.s32.totalorder %s13, 7
      %p105 = por %p103, %p104
      %p106 = scmp.ne.s32.totalorder %s98, %s101
      %p107 = scmp.eq.s32.totalorder %s13, 0
      %p108 = por %p106, %p107
      %p109 = scmp.ne.s32.totalorder %s98, %s101
      %p110 = scmp.eq.s32.totalorder %s18, 7
      %p111 = por %p109, %p110
      %p112 = scmp.ne.s32.totalorder %s101, %s102
      %p113 = scmp.eq.s32.totalorder %s18, 0
      %p114 = por %p112, %p113
      %p115 = scmp.ne.s32.totalorder %s101, %s102
      %p116 = scmp.eq.s32.totalorder %s19, 7
      %p117 = por %p115, %p116
      %p119 = scmp.ne.s32.totalorder %s102, %s118
      %p120 = scmp.eq.s32.totalorder %s19, 0
      %p121 = por %p119, %p120
      %p122 = scmp.le.s32.totalorder 1, %s13
      %p123 = scmp.lt.s32.totalorder %s13, 9
      %p124 = pnand %p122, %p123
      %p125 = pneg %p124
      // Predicated region
      $region9: #{tpu_custom_call.1} parent=5 // pred_check
        _
      $region10: #{tpu_custom_call.1} parent=5 // pred_check_branch
        %127 = sbr.rel (%p124) target = $region12
      $region11: #{tpu_custom_call.1} parent=5 // pred_region
        %s128 = ssub.s32 %s13, 1
      $region12: #{tpu_custom_call.1} parent=5 // pred_fallthru
        _
      %p129 = scmp.lt.s32.totalorder %s13, 8
      // Predicated region
      $region13: #{tpu_custom_call.1} parent=5 // pred_check
        %p130 = pneg %p129
      $region14: #{tpu_custom_call.1} parent=5 // pred_check_branch
        %132 = sbr.rel (%p130) target = $region16
      $region15: #{tpu_custom_call.1} parent=5 // pred_region
        // Predicated region
        $region17: #{tpu_custom_call.1} parent=15 // pred_check
          %p133 = pneg %p74
        $region18: #{tpu_custom_call.1} parent=15 // pred_check_branch
          %135 = sbr.rel (%p133) target = $region20
        $region19: #{tpu_custom_call.1} parent=15 // pred_region
          %s136 = sand.u32 %s64, 1
          %s137 = scalar_lea.sflag [#allocation3], %s136
          %s138 = sand.u32 %s64, 1
          %s139 = smul.addr %s138, 16
          %s140 = scalar_lea.vmem [#allocation2], %s139
          %s141 = smul.u32 16, %s23
          %s143 = ssub.s32 256, 256
          %144 = vsyncadd %s137, %s143
          %s145 = sadd.s32 %s24, %s141
          %s146 = smul.addr %s22, 16
          %s147 = sadd.s32 %s145, %s146
          %s148 = smul.addr %s20, 16
          %s149 = sadd.s32 %s147, %s148
          %s150 = smul.addr %s21, 64
          %s151 = sadd.s32 %s149, %s150
          %s152 = smul.addr %s151, 16
          %s153 = scalar_lea.hbm %s0, %s152
          %s154 = sshll.u32 %s140, 4
          %s155 = int_to_ptr.vmem [resolvable:$true] %s154
          %160 = dma.hbm_to_vmem [thread:$0]  %s153, 256, %s155, %s137, 16, 16, 1
        $region20: #{tpu_custom_call.1} parent=15 // pred_fallthru
          _
      $region16: #{tpu_custom_call.1} parent=5 // pred_fallthru
        _
      %p161 = scmp.le.s32.totalorder 1, %s13
      %p162 = scmp.lt.s32.totalorder %s13, 9
      %p163 = pnand %p161, %p162
      %p164 = pneg %p163
      // Predicated region
      $region21: #{tpu_custom_call.1} parent=5 // pred_check
        _
      $region22: #{tpu_custom_call.1} parent=5 // pred_check_branch
        %166 = sbr.rel (%p163) target = $region24
      $region23: #{tpu_custom_call.1} parent=5 // pred_region
        %s167 = ssub.s32 %s13, 1
        %s168 = sand.u32 %s67, 1
        %s169 = scalar_lea.sflag [#allocation3], %s168
        %s170 = sand.u32 %s67, 1
        %s171 = smul.addr %s170, 16
        %s172 = scalar_lea.vmem [#allocation2], %s171
        // Predicated region
        $region25: #{tpu_custom_call.1} parent=23 // pred_check
          %p173 = pneg %p80
        $region26: #{tpu_custom_call.1} parent=23 // pred_check_branch
          %175 = sbr.rel (%p173) target = $region28
        $region27: #{tpu_custom_call.1} parent=23 // pred_region
          %176 = dma.done %s169, 256
        $region28: #{tpu_custom_call.1} parent=23 // pred_fallthru
          _
        %s177 = sand.u32 %s67, 1
        %s178 = scalar_lea.sflag [#allocation3], %s177
        %s179 = sand.u32 %s67, 1
        %s180 = smul.addr %s179, 16
        %s181 = scalar_lea.vmem [#allocation2], %s180
        %p182 = pneg %p80
        %p183 = pneg %p77
        %p184 = pneg %p114
        %p185 = pneg %p111
        %s186 = sand.u32 %s101, 1
        %s187 = scalar_lea.sflag [#allocation4], %s186
        %s188 = sand.u32 %s101, 1
        %s189 = smul.addr %s188, 16
        %s190 = scalar_lea.vmem [#allocation5], %s189
        %s191 = smul.u32 16, %s28
        %s192 = smul.u32 16, %s28
        %v193 = vld [vmem:[%s172] sm:$0x1]
        %v194 = vld [vmem:[%s172 + $0x1] sm:$0x1]
        %v195 = vld [vmem:[%s172 + $0x2] sm:$0x1]
        %v196 = vld [vmem:[%s172 + $0x3] sm:$0x1]
        %v197 = vld [vmem:[%s172 + $0x4] sm:$0x1]
        %v198 = vld [vmem:[%s172 + $0x5] sm:$0x1]
        %v199 = vld [vmem:[%s172 + $0x6] sm:$0x1]
        %v200 = vld [vmem:[%s172 + $0x7] sm:$0x1]
        %v201 = vld [vmem:[%s172 + $0x8] sm:$0x1]
        %v202 = vld [vmem:[%s172 + $0x9] sm:$0x1]
        %v203 = vld [vmem:[%s172 + $0xa] sm:$0x1]
        %v204 = vld [vmem:[%s172 + $0xb] sm:$0x1]
        %v205 = vld [vmem:[%s172 + $0xc] sm:$0x1]
        %v206 = vld [vmem:[%s172 + $0xd] sm:$0x1]
        %v207 = vld [vmem:[%s172 + $0xe] sm:$0x1]
        %v208 = vld [vmem:[%s172 + $0xf] sm:$0x1]
        %vm209 = vcmask 122880
        %210 = vst.msk [vmem:[%s190] sm:$0x1] %vm209, %v193
        %211 = vst.msk [vmem:[%s190 + $0x1] sm:$0x1] %vm209, %v194
        %212 = vst.msk [vmem:[%s190 + $0x2] sm:$0x1] %vm209, %v195
        %213 = vst.msk [vmem:[%s190 + $0x3] sm:$0x1] %vm209, %v196
        %214 = vst.msk [vmem:[%s190 + $0x4] sm:$0x1] %vm209, %v197
        %215 = vst.msk [vmem:[%s190 + $0x5] sm:$0x1] %vm209, %v198
        %216 = vst.msk [vmem:[%s190 + $0x6] sm:$0x1] %vm209, %v199
        %217 = vst.msk [vmem:[%s190 + $0x7] sm:$0x1] %vm209, %v200
        %218 = vst.msk [vmem:[%s190 + $0x8] sm:$0x1] %vm209, %v201
        %219 = vst.msk [vmem:[%s190 + $0x9] sm:$0x1] %vm209, %v202
        %220 = vst.msk [vmem:[%s190 + $0xa] sm:$0x1] %vm209, %v203
        %221 = vst.msk [vmem:[%s190 + $0xb] sm:$0x1] %vm209, %v204
        %222 = vst.msk [vmem:[%s190 + $0xc] sm:$0x1] %vm209, %v205
        %223 = vst.msk [vmem:[%s190 + $0xd] sm:$0x1] %vm209, %v206
        %224 = vst.msk [vmem:[%s190 + $0xe] sm:$0x1] %vm209, %v207
        %225 = vst.msk [vmem:[%s190 + $0xf] sm:$0x1] %vm209, %v208
        %s226 = sand.u32 %s101, 1
        %s227 = scalar_lea.sflag [#allocation4], %s226
        %s228 = sand.u32 %s101, 1
        %s229 = smul.addr %s228, 16
        %s230 = scalar_lea.vmem [#allocation5], %s229
        // Predicated region
        $region29: #{tpu_custom_call.1} parent=23 // pred_check
          %p231 = pneg %p111
        $region30: #{tpu_custom_call.1} parent=23 // pred_check_branch
          %233 = sbr.rel (%p231) target = $region32
        $region31: #{tpu_custom_call.1} parent=23 // pred_region
          %s234 = smul.u32 16, %s28
          %s236 = ssub.s32 256, 256
          %237 = vsyncadd %s227, %s236
          %s238 = sadd.s32 %s29, %s25
          %s239 = smul.addr %s27, 4
          %s240 = sadd.s32 %s238, %s239
          %s241 = smul.addr %s234, 4
          %s242 = sadd.s32 %s240, %s241
          %s243 = smul.addr %s26, 64
          %s244 = sadd.s32 %s242, %s243
          %s245 = smul.addr %s244, 16
          %s246 = scalar_lea.hbm %s1, %s245
          %s247 = sshll.u32 %s230, 4
          %s248 = int_to_ptr.vmem [resolvable:$true] %s247
          %253 = dma.vmem_to_hbm [thread:$0]  %s248, 256, %s246, %s227, 16, 64, 1
        $region32: #{tpu_custom_call.1} parent=23 // pred_fallthru
          _
      $region24: #{tpu_custom_call.1} parent=5 // pred_fallthru
        _
      %p254 = scmp.le.s32.totalorder 2, %s13
      // Predicated region
      $region33: #{tpu_custom_call.1} parent=5 // pred_check
        %p255 = pneg %p254
      $region34: #{tpu_custom_call.1} parent=5 // pred_check_branch
        %257 = sbr.rel (%p255) target = $region36
      $region35: #{tpu_custom_call.1} parent=5 // pred_region
        %s258 = ssub.s32 %s13, 2
        // Predicated region
        $region37: #{tpu_custom_call.1} parent=35 // pred_check
          %p259 = pneg %p117
        $region38: #{tpu_custom_call.1} parent=35 // pred_check_branch
          %261 = sbr.rel (%p259) target = $region40
        $region39: #{tpu_custom_call.1} parent=35 // pred_region
          %s262 = sand.u32 %s102, 1
          %s263 = scalar_lea.sflag [#allocation4], %s262
          %s264 = sand.u32 %s102, 1
          %s265 = smul.addr %s264, 16
          %s266 = scalar_lea.vmem [#allocation5], %s265
          %267 = dma.done %s263, 256
        $region40: #{tpu_custom_call.1} parent=35 // pred_fallthru
          _
      $region36: #{tpu_custom_call.1} parent=5 // pred_fallthru
        _
    $region6: #{tpu_custom_call.1} parent=1 // loop_footer
      %s17 = sadd.s32 1, %s13
    $region7: #{tpu_custom_call.1} parent=1 // loop_footer_branch
      %12 = sbr.rel target = $region3
    $region8: #{tpu_custom_call.1} parent=1 // loop_exit
      _
    %268 = vsyncpa [#allocation3], 1
    %s269 = scalar_lea.sflag [#allocation3], 1
    %270 = vsyncpa %s269, 1
    %271 = vsyncpa [#allocation4], 1
    %s272 = scalar_lea.sflag [#allocation4], 1
    %273 = vsyncpa %s272, 1

</llo_original>
